<compile_context>
chip_gen: v5e
topology: v5e:2x2
jax: 0.10.0
libtpu: 0.0.40
codegen_flags: <defaults>
</compile_context>

<pallas_src>
import jax
import jax.numpy as jnp
from jax.experimental import pallas as pl
from jax.experimental.pallas import tpu as pltpu


def _round_up(a: int, m: int) -> int:
    return (a + m - 1) // m * m


def _ortho_dft_parts(n: int):
    """Real / imag parts (f32) of the symmetric (n, n) ortho DFT matrix."""
    k = jnp.arange(n, dtype=jnp.float32)
    ang = -2.0 * jnp.pi * jnp.outer(k, k) / n
    scale = 1.0 / jnp.sqrt(jnp.asarray(n, jnp.float32))
    return jnp.cos(ang) * scale, jnp.sin(ang) * scale


def _axis_response(n: int, g=None) -> jnp.ndarray:
    """Per-axis complex response  M = F @ diag(g) @ conj(F)  (identity filter when g is None)."""
    ar, ai = _ortho_dft_parts(n)
    if g is None:
        g = jnp.ones((n,), jnp.float32)           # identity frequency filter of the module
    br, bi = ar * g[None, :], ai * g[None, :]
    hp = jax.lax.Precision.HIGHEST
    mr = jnp.matmul(br, ar, precision=hp) + jnp.matmul(bi, ai, precision=hp)
    mi = jnp.matmul(bi, ar, precision=hp) - jnp.matmul(br, ai, precision=hp)
    return mr + 1j * mi                            # complex64


def _build_fused_residual(d: int, h: int, w: int, v_pad: int,
                          dtype=jnp.bfloat16) -> jnp.ndarray:
    """R = Re(F3 @ diag(g) @ conj(F3)) - I, zero-padded to (v_pad, v_pad), cast to `dtype`."""
    m3 = jnp.kron(jnp.kron(_axis_response(d), _axis_response(h)), _axis_response(w))
    wmat = jnp.real(m3).astype(jnp.float32)        # matches row-major flat index d*H*W + h*W + w
    v = d * h * w
    res = wmat - jnp.eye(v, dtype=jnp.float32)     # ~0 for the identity filter
    if v_pad != v:
        res = jnp.pad(res, ((0, v_pad - v), (0, v_pad - v)))
    return res.astype(dtype)


def _pick_col_tile(v_pad: int, max_tn: int, max_block_bytes: int) -> int:
    """Largest lane-aligned divisor of v_pad with v_pad*tn*2 bytes <= max_block_bytes."""
    q = v_pad // 128
    best = 1
    for t in range(1, q + 1):
        if q % t:
            continue
        tn = 128 * t
        if tn <= max_tn and v_pad * tn * 2 <= max_block_bytes:
            best = t
    return 128 * best


def _freq_filter_kernel(x_ref, r_ref, o_ref):
    # x_ref: (tm, V_pad) f32 row-tile of flattened volumes (VMEM-resident across column steps).
    # r_ref: (V_pad, tn) bf16 column-block of the fused response residual.
    # o_ref: (tm, tn)   f32 output column-block.
    tn = o_ref.shape[-1]
    j = pl.program_id(1)
    x = x_ref[...]
    corr = jnp.dot(x.astype(r_ref.dtype), r_ref[...],
                   preferred_element_type=jnp.float32)   # single bf16 MXU matmul, f32 acc
    col0 = pl.multiple_of(j * tn, 128)                   # lane-aligned dynamic column slice of x
    xj = x_ref[:, pl.ds(col0, tn)]
    o_ref[...] = (xj + corr).astype(o_ref.dtype)          # o = x @ W  (W = I + R)


def frequency_filter_module(x: jnp.ndarray) -> jnp.ndarray:
    """Pallas implementation of FrequencyFilterModule.forward for NCDHW input."""
    n, c, d, h, w = x.shape
    b = n * c
    v = d * h * w
    v_pad = _round_up(v, 128)                      # lane-dense columns for any D, H, W

    r_mat = _build_fused_residual(d, h, w, v_pad, dtype=jnp.bfloat16)   # (V_pad, V_pad) bf16
    x2 = x.reshape(b, v).astype(jnp.float32)

    # Row tile over the flattened batch axis (sublane-aligned, bounded VMEM for the x row-tile).
    b_pad = _round_up(b, 8)
    tm = min(b_pad, 256)
    while tm > 8 and tm * v_pad * 4 > 8 * 2**20:
        tm //= 2
    b_pad = _round_up(b_pad, tm)

    # Column tile over the response: lane-aligned divisor of V_pad, a few MiB per buffer.
    # Prefer >= 2 column steps so megacore (v7x) has something to shard even when B is tiny.
    max_tn = 512
    if v_pad >= 256:
        max_tn = min(max_tn, v_pad // 2)
    tn = _pick_col_tile(v_pad, max_tn=max_tn, max_block_bytes=8 * 2**20)

    if b_pad != b or v_pad != v:
        x2 = jnp.pad(x2, ((0, b_pad - b), (0, v_pad - v)))

    grid = (b_pad // tm, v_pad // tn)

    flops = 2 * b_pad * v_pad * v_pad
    bytes_accessed = (b_pad * v_pad * 4                       # x read
                      + (b_pad // tm) * v_pad * v_pad * 2     # residual read (per row tile)
                      + b_pad * v_pad * 4)                    # out write
    vmem_need = (2 * tm * v_pad * 4       # x row-tile (double-buffered)
                 + 2 * tm * tn * 4        # out tiles
                 + 2 * v_pad * tn * 2     # residual tiles
                 + tm * v_pad * 2)        # bf16 cast temp
    vmem_limit = int(min(64 * 2**20, max(2 * vmem_need, 32 * 2**20)))

    out2 = pl.pallas_call(
        _freq_filter_kernel,
        out_shape=jax.ShapeDtypeStruct((b_pad, v_pad), jnp.float32),
        grid_spec=pltpu.PrefetchScalarGridSpec(
            num_scalar_prefetch=0,
            grid=grid,
            in_specs=[
                pl.BlockSpec((tm, v_pad), lambda i, j: (i, 0)),   # x row-tile, resident over j
                pl.BlockSpec((v_pad, tn), lambda i, j: (0, j)),   # response column-blocks stream
            ],
            out_specs=pl.BlockSpec((tm, tn), lambda i, j: (i, j)),
        ),
        compiler_params=pltpu.CompilerParams(
            dimension_semantics=("parallel", "parallel"),
            vmem_limit_bytes=vmem_limit,
        ),
        cost_estimate=pl.CostEstimate(
            flops=int(flops),
            transcendentals=0,
            bytes_accessed=int(bytes_accessed),
        ),
    )(x2, r_mat)

    return out2[:b, :v].reshape(n, c, d, h, w).astype(x.dtype)


if __name__ == "__main__":
    key = jax.random.PRNGKey(0)
    # Small 3-D U-Net-like feature map: (N, C, D, H, W)
    x = jax.random.normal(key, (2, 4, 8, 8, 8), dtype=jnp.float32)

    out = jax.block_until_ready(frequency_filter_module(x))

    # Reference: fftn -> identity -> ifftn -> real
    ref = jnp.real(
        jnp.fft.ifftn(
            jnp.fft.fftn(x, axes=(-3, -2, -1), norm="ortho"),
            axes=(-3, -2, -1), norm="ortho",
        )
    )
    assert out.shape == x.shape and out.dtype == x.dtype
    err = float(jnp.max(jnp.abs(out - ref)))
    assert err < 5e-3, f"mismatch vs FFT reference: {err}"

    print("KERNEL_OK")
</pallas_src>

<mosaic_0001>
module attributes {stable_mosaic.version = 11 : i64} {
  func.func @_freq_filter_kernel(%arg0: i32, %arg1: i32, %arg2: memref<8x512xf32, #tpu.memory_space<vmem>>, %arg3: memref<512x256xbf16, #tpu.memory_space<vmem>>, %arg4: memref<8x256xf32, #tpu.memory_space<vmem>>) attributes {dimension_semantics = [#tpu.dimension_semantics<parallel>, #tpu.dimension_semantics<parallel>], iteration_bounds = array<i64: 1, 2>, scalar_prefetch = 0 : i64, scratch_operands = 0 : i64, tpu.core_type = #tpu.core_type<tc>, window_params = [{transform_indices = @transform_0, window_bounds = array<i64: 8, 512>}, {transform_indices = @transform_1, window_bounds = array<i64: 512, 256>}, {transform_indices = @transform_2, window_bounds = array<i64: 8, 256>}]} {
    %c0 = arith.constant 0 : index
    %c0_0 = arith.constant 0 : index
    %0 = vector.load %arg2[%c0, %c0_0] : memref<8x512xf32, #tpu.memory_space<vmem>>, vector<8x512xf32>
    %1 = arith.truncf %0 : vector<8x512xf32> to vector<8x512xbf16>
    %c0_1 = arith.constant 0 : index
    %c0_2 = arith.constant 0 : index
    %2 = vector.load %arg3[%c0_1, %c0_2] : memref<512x256xbf16, #tpu.memory_space<vmem>>, vector<512x256xbf16>
    %cst = arith.constant dense<0.000000e+00> : vector<8x256xf32>
    %3 = tpu.matmul %1, %2, %cst {dimension_numbers = #tpu.dot_dimension_numbers<[1], [0], [0], [1], [0, 0, 1, 1], [], []>} : vector<8x512xbf16>, vector<512x256xbf16>, vector<8x256xf32> -> vector<8x256xf32>
    %c256_i32 = arith.constant 256 : i32
    %4 = arith.muli %arg1, %c256_i32 : i32
    %5 = tpu.assume_multiple %4, 128 : i32
    %c0_3 = arith.constant 0 : index
    %6 = arith.index_cast %5 : i32 to index
    %7 = vector.load %arg2[%c0_3, %6] : memref<8x512xf32, #tpu.memory_space<vmem>>, vector<8x256xf32>
    %8 = arith.addf %7, %3 : vector<8x256xf32>
    %c0_4 = arith.constant 0 : index
    %c0_5 = arith.constant 0 : index
    %9 = vector.load %arg4[%c0_4, %c0_5] : memref<8x256xf32, #tpu.memory_space<vmem>>, vector<8x256xf32>
    tpu.vector_store %arg4[%c0_4, %c0_5], %8 {strides = array<i32>} : memref<8x256xf32, #tpu.memory_space<vmem>>, vector<8x256xf32>,
    return
  }
  func.func @transform_0(%arg0: i32, %arg1: i32) -> (i32, i32) {
    %c0_i32 = arith.constant 0 : i32
    %c0_i32_0 = arith.constant 0 : i32
    return %arg0, %c0_i32 : i32, i32
  }
  func.func @transform_1(%arg0: i32, %arg1: i32) -> (i32, i32) {
    %c0_i32 = arith.constant 0 : i32
    %c0_i32_0 = arith.constant 0 : i32
    return %c0_i32, %arg1 : i32, i32
  }
  func.func @transform_2(%arg0: i32, %arg1: i32) -> (i32, i32) {
    %c0_i32 = arith.constant 0 : i32
    return %arg0, %arg1 : i32, i32
  }
}

</mosaic_0001>

<llo_original>
// kernel: tpu_custom_call.1
$region0: #{tpu_custom_call.1}
  #allocation0 [shape = 'u32[]', space=smem, size = 0x4, offset = 0x4, fixed_abs, tag = 'smem constant byte address 0x4 - core index']
  #allocation1 [shape = 'u32[72,128]{1,0:T(1,128)}', space=vmem, size = 0x9000, scoped, tag = 'internal scratch']
  %s0 = inlined_call_operand.hbm [shape: f32[8,512], index: 0, kind: input, shape index: {}]
  %s1 = inlined_call_operand.hbm [shape: bf16[512,512], index: 1, kind: input, shape index: {}]
  %s2 = inlined_call_operand.hbm [shape: f32[8,512], index: 2, kind: output, shape index: {}]
  %s3 = sld [smem:[#allocation0]]
  $region49: #{tpu_custom_call.1} parent=0
    _
  %s5 = ssub.s32 1, %s3
  %s6 = scalar_select 0, %s5, %s3
  $region1: #{tpu_custom_call.1} parent=0
    #allocation2 [shape = 'u8[16384]{0}', space=vmem, size = 0x4000, scoped, tag = 'input window, operand 0, single buffered']
    #allocation3 [shape = 's32[2]{0}', space=sflag, size = 0x8, scoped, tag = 'scoped memory for tpu_custom_call.1']
    #allocation4 [shape = 's32[2]{0}', space=sflag, size = 0x8, scoped, tag = 'scoped memory for tpu_custom_call.1']
    #allocation5 [shape = 'u8[524288]{0}', space=vmem, size = 0x80000, scoped, tag = 'input window, operand 1']
    #allocation6 [shape = 's32[2]{0}', space=sflag, size = 0x8, scoped, tag = 'scoped memory for tpu_custom_call.1']
    #allocation7 [shape = 'u8[16384]{0}', space=vmem, size = 0x4000, scoped, tag = 'output window, operand 0']
    %7 = vsyncpa [#allocation3], 0
    %8 = vsyncpa [#allocation6], 0
    %s9 = scalar_lea.sflag [#allocation6], 1
    %10 = vsyncpa %s9, 0
    %11 = vsyncpa [#allocation4], 0
    %s12 = scalar_lea.sflag [#allocation4], 1
    %13 = vsyncpa %s12, 0
    loop: start=0, step=1, limit=4
    $region2: #{tpu_custom_call.1} parent=1 // loop_pre_header
      _
    $region3: #{tpu_custom_call.1} parent=1 // loop_header
      %s15 = sphi 0, %s19
      %p16 = scmp.ge.s32.totalorder %s15, 4
      %s22 = sphi 0, %s34
      %s23 = sphi 0, %s30
      %s24 = sphi 0, %s22
      %s25 = sphi 0, %s23
      %s26 = sphi 0, %s24
      %s27 = sphi 0, %s25
      %s37 = sphi 0, %s39
      %s40 = sphi 0, %s37
      %s41 = sphi 0, %s40
      %s57 = sphi 0, %s41
      %s63 = sphi 0, %s65
      %s66 = sphi 0, %s63
      %s67 = sphi 0, %s66
      %s83 = sphi 0, %s67
      %s91 = sphi 0, %s93
      %s94 = sphi 0, %s91
      %s95 = sphi 0, %s94
      %s111 = sphi 0, %s95
    $region4: #{tpu_custom_call.1} parent=1 // loop_header_branch
      %18 = sbr.rel (%p16) target = $region8
    $region5: #{tpu_custom_call.1} parent=1 // loop_body
      %s20 = ssub.s32 %s15, 1
      %s21 = ssub.s32 %s15, 2
      %s28 = sadd.s32 1, %s23
      %p29 = scmp.ge.s32.totalorder %s28, 2
      %s30 = scalar_select %p29, 0, %s28
      %s31 = sadd.s32 1, %s22
      %s32 = scalar_select %p29, %s31, %s22
      %p33 = scmp.ge.s32.totalorder %s32, 1
      %s34 = scalar_select %p33, 0, %s32
      %s35 = ssub.s32 %s22, %s34
      %p36 = scmp.eq.s32.totalorder %s35, 0
      %s38 = sadd.s32 %s37, 1
      %s39 = scalar_select %p36, %s37, %s38
      %p42 = pneg %p36
      %p43 = scmp.eq.s32.totalorder %s15, 1
      %p44 = por %p42, %p43
      %p45 = scmp.ne.s32.totalorder %s37, %s40
      %p46 = scmp.eq.s32.totalorder %s15, 0
      %p47 = por %p45, %p46
      %p48 = scmp.ne.s32.totalorder %s37, %s40
      %p49 = scmp.eq.s32.totalorder %s20, 1
      %p50 = por %p48, %p49
      %p51 = scmp.ne.s32.totalorder %s40, %s41
      %p52 = scmp.eq.s32.totalorder %s20, 0
      %p53 = por %p51, %p52
      %p54 = scmp.ne.s32.totalorder %s40, %s41
      %p55 = scmp.eq.s32.totalorder %s21, 1
      %p56 = por %p54, %p55
      %p58 = scmp.ne.s32.totalorder %s41, %s57
      %p59 = scmp.eq.s32.totalorder %s21, 0
      %p60 = por %p58, %p59
      %s61 = ssub.s32 %s23, %s30
      %p62 = scmp.eq.s32.totalorder %s61, 0
      %s64 = sadd.s32 %s63, 1
      %s65 = scalar_select %p62, %s63, %s64
      %p68 = pneg %p62
      %p69 = scmp.eq.s32.totalorder %s15, 1
      %p70 = por %p68, %p69
      %p71 = scmp.ne.s32.totalorder %s63, %s66
      %p72 = scmp.eq.s32.totalorder %s15, 0
      %p73 = por %p71, %p72
      %p74 = scmp.ne.s32.totalorder %s63, %s66
      %p75 = scmp.eq.s32.totalorder %s20, 1
      %p76 = por %p74, %p75
      %p77 = scmp.ne.s32.totalorder %s66, %s67
      %p78 = scmp.eq.s32.totalorder %s20, 0
      %p79 = por %p77, %p78
      %p80 = scmp.ne.s32.totalorder %s66, %s67
      %p81 = scmp.eq.s32.totalorder %s21, 1
      %p82 = por %p80, %p81
      %p84 = scmp.ne.s32.totalorder %s67, %s83
      %p85 = scmp.eq.s32.totalorder %s21, 0
      %p86 = por %p84, %p85
      %s87 = ssub.s32 %s22, %s34
      %s88 = ssub.s32 %s23, %s30
      %s89 = sor.u32 %s87, %s88
      %p90 = scmp.eq.s32.totalorder %s89, 0
      %s92 = sadd.s32 %s91, 1
      %s93 = scalar_select %p90, %s91, %s92
      %p96 = pneg %p90
      %p97 = scmp.eq.s32.totalorder %s15, 1
      %p98 = por %p96, %p97
      %p99 = scmp.ne.s32.totalorder %s91, %s94
      %p100 = scmp.eq.s32.totalorder %s15, 0
      %p101 = por %p99, %p100
      %p102 = scmp.ne.s32.totalorder %s91, %s94
      %p103 = scmp.eq.s32.totalorder %s20, 1
      %p104 = por %p102, %p103
      %p105 = scmp.ne.s32.totalorder %s94, %s95
      %p106 = scmp.eq.s32.totalorder %s20, 0
      %p107 = por %p105, %p106
      %p108 = scmp.ne.s32.totalorder %s94, %s95
      %p109 = scmp.eq.s32.totalorder %s21, 1
      %p110 = por %p108, %p109
      %p112 = scmp.ne.s32.totalorder %s95, %s111
      %p113 = scmp.eq.s32.totalorder %s21, 0
      %p114 = por %p112, %p113
      %p115 = scmp.le.s32.totalorder 1, %s15
      %p116 = scmp.lt.s32.totalorder %s15, 3
      %p117 = pnand %p115, %p116
      %p118 = pneg %p117
      // Predicated region
      $region9: #{tpu_custom_call.1} parent=5 // pred_check
        _
      $region10: #{tpu_custom_call.1} parent=5 // pred_check_branch
        %120 = sbr.rel (%p117) target = $region12
      $region11: #{tpu_custom_call.1} parent=5 // pred_region
        %s121 = ssub.s32 %s15, 1
        // Predicated region
        $region13: #{tpu_custom_call.1} parent=11 // pred_check
          %p122 = pneg %p53
        $region14: #{tpu_custom_call.1} parent=11 // pred_check_branch
          %124 = sbr.rel (%p122) target = $region16
        $region15: #{tpu_custom_call.1} parent=11 // pred_region
          %126 = vsyncadd [#allocation3], 0
          %s127 = smul.addr %s24, 4
          %s128 = smul.addr %s127, 8
          %s129 = scalar_lea.hbm %s0, %s128
          %s131 = sshll.u32 %s129, 4
          %s132 = int_to_ptr.hbm [resolvable:$true] %s131
          %s133 = sshll.u32 [#allocation2], 4
          %s134 = int_to_ptr.vmem [resolvable:$true] %s133
          %136 = dma.hbm_to_vmem [thread:$0]  %s132, 512, %s134, [#allocation3]
        $region16: #{tpu_custom_call.1} parent=11 // pred_fallthru
          _
      $region12: #{tpu_custom_call.1} parent=5 // pred_fallthru
        _
      %p137 = scmp.lt.s32.totalorder %s15, 2
      // Predicated region
      $region17: #{tpu_custom_call.1} parent=5 // pred_check
        %p138 = pneg %p137
      $region18: #{tpu_custom_call.1} parent=5 // pred_check_branch
        %140 = sbr.rel (%p138) target = $region20
      $region19: #{tpu_custom_call.1} parent=5 // pred_region
        // Predicated region
        $region21: #{tpu_custom_call.1} parent=19 // pred_check
          %p141 = pneg %p73
        $region22: #{tpu_custom_call.1} parent=19 // pred_check_branch
          %143 = sbr.rel (%p141) target = $region24
        $region23: #{tpu_custom_call.1} parent=19 // pred_region
          %s144 = sand.u32 %s63, 1
          %s145 = scalar_lea.sflag [#allocation6], %s144
          %s146 = sand.u32 %s63, 1
          %s147 = smul.addr %s146, 512
          %s148 = scalar_lea.vmem [#allocation5], %s147
          %s149 = smul.u32 2, %s23
          %151 = vsyncadd %s145, 0
          %s152 = smul.addr %s149, 4
          %s153 = scalar_lea.hbm %s1, %s152
          %s154 = sshll.u32 %s153, 4
          %s155 = int_to_ptr.hbm [resolvable:$true] %s154
          %s156 = sshll.u32 %s148, 4
          %s157 = int_to_ptr.vmem [resolvable:$true] %s156
          %162 = dma.hbm_to_vmem [thread:$0]  %s155, 8192, %s157, %s145, 256, 128, 8
        $region24: #{tpu_custom_call.1} parent=19 // pred_fallthru
          _
      $region20: #{tpu_custom_call.1} parent=5 // pred_fallthru
        _
      %p163 = scmp.le.s32.totalorder 1, %s15
      %p164 = scmp.lt.s32.totalorder %s15, 3
      %p165 = pnand %p163, %p164
      %p166 = pneg %p165
      // Predicated region
      $region25: #{tpu_custom_call.1} parent=5 // pred_check
        _
      $region26: #{tpu_custom_call.1} parent=5 // pred_check_branch
        %168 = sbr.rel (%p165) target = $region28
      $region27: #{tpu_custom_call.1} parent=5 // pred_region
        %s169 = ssub.s32 %s15, 1
        // Predicated region
        $region29: #{tpu_custom_call.1} parent=27 // pred_check
          %p170 = pneg %p53
        $region30: #{tpu_custom_call.1} parent=27 // pred_check_branch
          %172 = sbr.rel (%p170) target = $region32
        $region31: #{tpu_custom_call.1} parent=27 // pred_region
          %174 = dma.done [#allocation3], 512
        $region32: #{tpu_custom_call.1} parent=27 // pred_fallthru
          _
        %s175 = sand.u32 %s66, 1
        %s176 = scalar_lea.sflag [#allocation6], %s175
        %s177 = sand.u32 %s66, 1
        %s178 = smul.addr %s177, 512
        %s179 = scalar_lea.vmem [#allocation5], %s178
        // Predicated region
        $region33: #{tpu_custom_call.1} parent=27 // pred_check
          %p180 = pneg %p79
        $region34: #{tpu_custom_call.1} parent=27 // pred_check_branch
          %182 = sbr.rel (%p180) target = $region36
        $region35: #{tpu_custom_call.1} parent=27 // pred_region
          %184 = dma.done %s176, 8192
        $region36: #{tpu_custom_call.1} parent=27 // pred_fallthru
          _
        %p185 = pneg %p53
        %p186 = pneg %p50
        %s187 = sand.u32 %s66, 1
        %s188 = scalar_lea.sflag [#allocation6], %s187
        %s189 = sand.u32 %s66, 1
        %s190 = smul.addr %s189, 512
        %s191 = scalar_lea.vmem [#allocation5], %s190
        %p192 = pneg %p79
        %p193 = pneg %p76
        %p194 = pneg %p107
        %p195 = pneg %p104
        %s196 = sand.u32 %s94, 1
        %s197 = scalar_lea.sflag [#allocation4], %s196
        %s198 = sand.u32 %s94, 1
        %s199 = smul.addr %s198, 16
        %s200 = scalar_lea.vmem [#allocation7], %s199
        %s201 = smul.u32 2, %s25
        %s202 = smul.u32 2, %s25
        %v203 = vld [vmem:[#allocation2] sm:$0xff]
        %v204 = vld [vmem:[#allocation2 + $0x8] sm:$0xff]
        %v205 = vld [vmem:[#allocation2 + $0x10] sm:$0xff]
        %v206 = vld [vmem:[#allocation2 + $0x18] sm:$0xff]
        %v207 = vpack.c.bf16 %v203, %v203
        %v208 = vpack.c.bf16 %v204, %v204
        %v209 = vpack.c.bf16 %v205, %v205
        %v210 = vpack.c.bf16 %v206, %v206
        %v211 = vld [vmem:[%s179] sm:$0xff]
        %v212 = vld [vmem:[%s179 + $0x8] sm:$0xff]
        %v213 = vld [vmem:[%s179 + $0x10] sm:$0xff]
        %v214 = vld [vmem:[%s179 + $0x18] sm:$0xff]
        %v215 = vld [vmem:[%s179 + $0x20] sm:$0xff]
        %v216 = vld [vmem:[%s179 + $0x28] sm:$0xff]
        %v217 = vld [vmem:[%s179 + $0x30] sm:$0xff]
        %v218 = vld [vmem:[%s179 + $0x38] sm:$0xff]
        %v219 = vld [vmem:[%s179 + $0x40] sm:$0xff]
        %v220 = vld [vmem:[%s179 + $0x48] sm:$0xff]
        %v221 = vld [vmem:[%s179 + $0x50] sm:$0xff]
        %v222 = vld [vmem:[%s179 + $0x58] sm:$0xff]
        %v223 = vld [vmem:[%s179 + $0x60] sm:$0xff]
        %v224 = vld [vmem:[%s179 + $0x68] sm:$0xff]
        %v225 = vld [vmem:[%s179 + $0x70] sm:$0xff]
        %v226 = vld [vmem:[%s179 + $0x78] sm:$0xff]
        %v227 = vld [vmem:[%s179 + $0x80] sm:$0xff]
        %v228 = vld [vmem:[%s179 + $0x88] sm:$0xff]
        %v229 = vld [vmem:[%s179 + $0x90] sm:$0xff]
        %v230 = vld [vmem:[%s179 + $0x98] sm:$0xff]
        %v231 = vld [vmem:[%s179 + $0xa0] sm:$0xff]
        %v232 = vld [vmem:[%s179 + $0xa8] sm:$0xff]
        %v233 = vld [vmem:[%s179 + $0xb0] sm:$0xff]
        %v234 = vld [vmem:[%s179 + $0xb8] sm:$0xff]
        %v235 = vld [vmem:[%s179 + $0xc0] sm:$0xff]
        %v236 = vld [vmem:[%s179 + $0xc8] sm:$0xff]
        %v237 = vld [vmem:[%s179 + $0xd0] sm:$0xff]
        %v238 = vld [vmem:[%s179 + $0xd8] sm:$0xff]
        %v239 = vld [vmem:[%s179 + $0xe0] sm:$0xff]
        %v240 = vld [vmem:[%s179 + $0xe8] sm:$0xff]
        %v241 = vld [vmem:[%s179 + $0xf0] sm:$0xff]
        %v242 = vld [vmem:[%s179 + $0xf8] sm:$0xff]
        %v243 = vld [vmem:[%s179 + $0x100] sm:$0xff]
        %v244 = vld [vmem:[%s179 + $0x108] sm:$0xff]
        %v245 = vld [vmem:[%s179 + $0x110] sm:$0xff]
        %v246 = vld [vmem:[%s179 + $0x118] sm:$0xff]
        %v247 = vld [vmem:[%s179 + $0x120] sm:$0xff]
        %v248 = vld [vmem:[%s179 + $0x128] sm:$0xff]
        %v249 = vld [vmem:[%s179 + $0x130] sm:$0xff]
        %v250 = vld [vmem:[%s179 + $0x138] sm:$0xff]
        %v251 = vld [vmem:[%s179 + $0x140] sm:$0xff]
        %v252 = vld [vmem:[%s179 + $0x148] sm:$0xff]
        %v253 = vld [vmem:[%s179 + $0x150] sm:$0xff]
        %v254 = vld [vmem:[%s179 + $0x158] sm:$0xff]
        %v255 = vld [vmem:[%s179 + $0x160] sm:$0xff]
        %v256 = vld [vmem:[%s179 + $0x168] sm:$0xff]
        %v257 = vld [vmem:[%s179 + $0x170] sm:$0xff]
        %v258 = vld [vmem:[%s179 + $0x178] sm:$0xff]
        %v259 = vld [vmem:[%s179 + $0x180] sm:$0xff]
        %v260 = vld [vmem:[%s179 + $0x188] sm:$0xff]
        %v261 = vld [vmem:[%s179 + $0x190] sm:$0xff]
        %v262 = vld [vmem:[%s179 + $0x198] sm:$0xff]
        %v263 = vld [vmem:[%s179 + $0x1a0] sm:$0xff]
        %v264 = vld [vmem:[%s179 + $0x1a8] sm:$0xff]
        %v265 = vld [vmem:[%s179 + $0x1b0] sm:$0xff]
        %v266 = vld [vmem:[%s179 + $0x1b8] sm:$0xff]
        %v267 = vld [vmem:[%s179 + $0x1c0] sm:$0xff]
        %v268 = vld [vmem:[%s179 + $0x1c8] sm:$0xff]
        %v269 = vld [vmem:[%s179 + $0x1d0] sm:$0xff]
        %v270 = vld [vmem:[%s179 + $0x1d8] sm:$0xff]
        %v271 = vld [vmem:[%s179 + $0x1e0] sm:$0xff]
        %v272 = vld [vmem:[%s179 + $0x1e8] sm:$0xff]
        %v273 = vld [vmem:[%s179 + $0x1f0] sm:$0xff]
        %v274 = vld [vmem:[%s179 + $0x1f8] sm:$0xff]
        %v339 = vunpack.c.l.b16 %v211
        %v340 = vunpack.c.h.b16 %v211
        %v341 = vunpack.c.l.b16 %v212
        %v342 = vunpack.c.h.b16 %v212
        %v343 = vunpack.c.l.b16 %v213
        %v344 = vunpack.c.h.b16 %v213
        %v345 = vunpack.c.l.b16 %v214
        %v346 = vunpack.c.h.b16 %v214
        %v347 = vunpack.c.l.b16 %v215
        %v348 = vunpack.c.h.b16 %v215
        %v349 = vunpack.c.l.b16 %v216
        %v350 = vunpack.c.h.b16 %v216
        %v351 = vunpack.c.l.b16 %v217
        %v352 = vunpack.c.h.b16 %v217
        %v353 = vunpack.c.l.b16 %v218
        %v354 = vunpack.c.h.b16 %v218
        %v355 = vunpack.c.l.b16 %v219
        %v356 = vunpack.c.h.b16 %v219
        %v357 = vunpack.c.l.b16 %v220
        %v358 = vunpack.c.h.b16 %v220
        %v359 = vunpack.c.l.b16 %v221
        %v360 = vunpack.c.h.b16 %v221
        %v361 = vunpack.c.l.b16 %v222
        %v362 = vunpack.c.h.b16 %v222
        %v363 = vunpack.c.l.b16 %v223
        %v364 = vunpack.c.h.b16 %v223
        %v365 = vunpack.c.l.b16 %v224
        %v366 = vunpack.c.h.b16 %v224
        %v367 = vunpack.c.l.b16 %v225
        %v368 = vunpack.c.h.b16 %v225
        %v369 = vunpack.c.l.b16 %v226
        %v370 = vunpack.c.h.b16 %v226
        %v371 = vunpack.c.l.b16 %v227
        %v372 = vunpack.c.h.b16 %v227
        %v373 = vunpack.c.l.b16 %v228
        %v374 = vunpack.c.h.b16 %v228
        %v375 = vunpack.c.l.b16 %v229
        %v376 = vunpack.c.h.b16 %v229
        %v377 = vunpack.c.l.b16 %v230
        %v378 = vunpack.c.h.b16 %v230
        %v379 = vunpack.c.l.b16 %v231
        %v380 = vunpack.c.h.b16 %v231
        %v381 = vunpack.c.l.b16 %v232
        %v382 = vunpack.c.h.b16 %v232
        %v383 = vunpack.c.l.b16 %v233
        %v384 = vunpack.c.h.b16 %v233
        %v385 = vunpack.c.l.b16 %v234
        %v386 = vunpack.c.h.b16 %v234
        %v387 = vunpack.c.l.b16 %v235
        %v388 = vunpack.c.h.b16 %v235
        %v389 = vunpack.c.l.b16 %v236
        %v390 = vunpack.c.h.b16 %v236
        %v391 = vunpack.c.l.b16 %v237
        %v392 = vunpack.c.h.b16 %v237
        %v393 = vunpack.c.l.b16 %v238
        %v394 = vunpack.c.h.b16 %v238
        %v395 = vunpack.c.l.b16 %v239
        %v396 = vunpack.c.h.b16 %v239
        %v397 = vunpack.c.l.b16 %v240
        %v398 = vunpack.c.h.b16 %v240
        %v399 = vunpack.c.l.b16 %v241
        %v400 = vunpack.c.h.b16 %v241
        %v401 = vunpack.c.l.b16 %v242
        %v402 = vunpack.c.h.b16 %v242
        %v403 = vunpack.c.l.b16 %v243
        %v404 = vunpack.c.h.b16 %v243
        %v405 = vunpack.c.l.b16 %v244
        %v406 = vunpack.c.h.b16 %v244
        %v407 = vunpack.c.l.b16 %v245
        %v408 = vunpack.c.h.b16 %v245
        %v409 = vunpack.c.l.b16 %v246
        %v410 = vunpack.c.h.b16 %v246
        %v411 = vunpack.c.l.b16 %v247
        %v412 = vunpack.c.h.b16 %v247
        %v413 = vunpack.c.l.b16 %v248
        %v414 = vunpack.c.h.b16 %v248
        %v415 = vunpack.c.l.b16 %v249
        %v416 = vunpack.c.h.b16 %v249
        %v417 = vunpack.c.l.b16 %v250
        %v418 = vunpack.c.h.b16 %v250
        %v419 = vunpack.c.l.b16 %v251
        %v420 = vunpack.c.h.b16 %v251
        %v421 = vunpack.c.l.b16 %v252
        %v422 = vunpack.c.h.b16 %v252
        %v423 = vunpack.c.l.b16 %v253
        %v424 = vunpack.c.h.b16 %v253
        %v425 = vunpack.c.l.b16 %v254
        %v426 = vunpack.c.h.b16 %v254
        %v427 = vunpack.c.l.b16 %v255
        %v428 = vunpack.c.h.b16 %v255
        %v429 = vunpack.c.l.b16 %v256
        %v430 = vunpack.c.h.b16 %v256
        %v431 = vunpack.c.l.b16 %v257
        %v432 = vunpack.c.h.b16 %v257
        %v433 = vunpack.c.l.b16 %v258
        %v434 = vunpack.c.h.b16 %v258
        %v435 = vunpack.c.l.b16 %v259
        %v436 = vunpack.c.h.b16 %v259
        %v437 = vunpack.c.l.b16 %v260
        %v438 = vunpack.c.h.b16 %v260
        %v439 = vunpack.c.l.b16 %v261
        %v440 = vunpack.c.h.b16 %v261
        %v441 = vunpack.c.l.b16 %v262
        %v442 = vunpack.c.h.b16 %v262
        %v443 = vunpack.c.l.b16 %v263
        %v444 = vunpack.c.h.b16 %v263
        %v445 = vunpack.c.l.b16 %v264
        %v446 = vunpack.c.h.b16 %v264
        %v447 = vunpack.c.l.b16 %v265
        %v448 = vunpack.c.h.b16 %v265
        %v449 = vunpack.c.l.b16 %v266
        %v450 = vunpack.c.h.b16 %v266
        %v451 = vunpack.c.l.b16 %v267
        %v452 = vunpack.c.h.b16 %v267
        %v453 = vunpack.c.l.b16 %v268
        %v454 = vunpack.c.h.b16 %v268
        %v455 = vunpack.c.l.b16 %v269
        %v456 = vunpack.c.h.b16 %v269
        %v457 = vunpack.c.l.b16 %v270
        %v458 = vunpack.c.h.b16 %v270
        %v459 = vunpack.c.l.b16 %v271
        %v460 = vunpack.c.h.b16 %v271
        %v461 = vunpack.c.l.b16 %v272
        %v462 = vunpack.c.h.b16 %v272
        %v463 = vunpack.c.l.b16 %v273
        %v464 = vunpack.c.h.b16 %v273
        %v465 = vunpack.c.l.b16 %v274
        %v466 = vunpack.c.h.b16 %v274
        %v467 = vpack.c.b16 %v341, %v339
        %v468 = vpack.c.b16 %v342, %v340
        %v469 = vpack.c.b16 %v345, %v343
        %v470 = vpack.c.b16 %v346, %v344
        %v471 = vpack.c.b16 %v349, %v347
        %v472 = vpack.c.b16 %v350, %v348
        %v473 = vpack.c.b16 %v353, %v351
        %v474 = vpack.c.b16 %v354, %v352
        %v475 = vpack.c.b16 %v357, %v355
        %v476 = vpack.c.b16 %v358, %v356
        %v477 = vpack.c.b16 %v361, %v359
        %v478 = vpack.c.b16 %v362, %v360
        %v479 = vpack.c.b16 %v365, %v363
        %v480 = vpack.c.b16 %v366, %v364
        %v481 = vpack.c.b16 %v369, %v367
        %v482 = vpack.c.b16 %v370, %v368
        %v483 = vpack.c.b16 %v373, %v371
        %v484 = vpack.c.b16 %v374, %v372
        %v485 = vpack.c.b16 %v377, %v375
        %v486 = vpack.c.b16 %v378, %v376
        %v487 = vpack.c.b16 %v381, %v379
        %v488 = vpack.c.b16 %v382, %v380
        %v489 = vpack.c.b16 %v385, %v383
        %v490 = vpack.c.b16 %v386, %v384
        %v491 = vpack.c.b16 %v389, %v387
        %v492 = vpack.c.b16 %v390, %v388
        %v493 = vpack.c.b16 %v393, %v391
        %v494 = vpack.c.b16 %v394, %v392
        %v495 = vpack.c.b16 %v397, %v395
        %v496 = vpack.c.b16 %v398, %v396
        %v497 = vpack.c.b16 %v401, %v399
        %v498 = vpack.c.b16 %v402, %v400
        %v499 = vpack.c.b16 %v405, %v403
        %v500 = vpack.c.b16 %v406, %v404
        %v501 = vpack.c.b16 %v409, %v407
        %v502 = vpack.c.b16 %v410, %v408
        %v503 = vpack.c.b16 %v413, %v411
        %v504 = vpack.c.b16 %v414, %v412
        %v505 = vpack.c.b16 %v417, %v415
        %v506 = vpack.c.b16 %v418, %v416
        %v507 = vpack.c.b16 %v421, %v419
        %v508 = vpack.c.b16 %v422, %v420
        %v509 = vpack.c.b16 %v425, %v423
        %v510 = vpack.c.b16 %v426, %v424
        %v511 = vpack.c.b16 %v429, %v427
        %v512 = vpack.c.b16 %v430, %v428
        %v513 = vpack.c.b16 %v433, %v431
        %v514 = vpack.c.b16 %v434, %v432
        %v515 = vpack.c.b16 %v437, %v435
        %v516 = vpack.c.b16 %v438, %v436
        %v517 = vpack.c.b16 %v441, %v439
        %v518 = vpack.c.b16 %v442, %v440
        %v519 = vpack.c.b16 %v445, %v443
        %v520 = vpack.c.b16 %v446, %v444
        %v521 = vpack.c.b16 %v449, %v447
        %v522 = vpack.c.b16 %v450, %v448
        %v523 = vpack.c.b16 %v453, %v451
        %v524 = vpack.c.b16 %v454, %v452
        %v525 = vpack.c.b16 %v457, %v455
        %v526 = vpack.c.b16 %v458, %v456
        %v527 = vpack.c.b16 %v461, %v459
        %v528 = vpack.c.b16 %v462, %v460
        %v529 = vpack.c.b16 %v465, %v463
        %v530 = vpack.c.b16 %v466, %v464
        %595 = vmatpush.bf16.msra.mxu0 %v481
        %596 = vmatpush.bf16.msra.mxu0 %v479
        %597 = vmatpush.bf16.msra.mxu0 %v477
        %598 = vmatpush.bf16.msra.mxu0 %v475
        %599 = vmatpush.bf16.msra.mxu0 %v473
        %600 = vmatpush.bf16.msra.mxu0 %v471
        %601 = vmatpush.bf16.msra.mxu0 %v469
        %602 = vmatpush.bf16.msra.mxu0 %v467
        %603 = vmatmul.bf16.gmra.mxu0 %v207
        %v604 = vpop.f32.mrf.mxu0
        %v605 = vadd.f32 0.0, %v604
        %v606 = vpop.f32.mrf.mxu0
        %607 = vdwg.mxu0
        %608 = vmatpush.bf16.msra.mxu0 %v497
        %609 = vmatpush.bf16.msra.mxu0 %v495
        %610 = vmatpush.bf16.msra.mxu0 %v493
        %611 = vmatpush.bf16.msra.mxu0 %v491
        %612 = vmatpush.bf16.msra.mxu0 %v489
        %613 = vmatpush.bf16.msra.mxu0 %v487
        %614 = vmatpush.bf16.msra.mxu0 %v485
        %615 = vmatpush.bf16.msra.mxu0 %v483
        %616 = vmatmul.bf16.gmra.mxu0 %v208
        %v617 = vpop.f32.mrf.mxu0
        %v618 = vadd.f32 %v605, %v617
        %v619 = vpop.f32.mrf.mxu0
        %620 = vdwg.mxu0
        %621 = vmatpush.bf16.msra.mxu0 %v513
        %622 = vmatpush.bf16.msra.mxu0 %v511
        %623 = vmatpush.bf16.msra.mxu0 %v509
        %624 = vmatpush.bf16.msra.mxu0 %v507
        %625 = vmatpush.bf16.msra.mxu0 %v505
        %626 = vmatpush.bf16.msra.mxu0 %v503
        %627 = vmatpush.bf16.msra.mxu0 %v501
        %628 = vmatpush.bf16.msra.mxu0 %v499
        %629 = vmatmul.bf16.gmra.mxu0 %v209
        %v630 = vpop.f32.mrf.mxu0
        %v631 = vadd.f32 %v618, %v630
        %v632 = vpop.f32.mrf.mxu0
        %633 = vdwg.mxu0
        %634 = vmatpush.bf16.msra.mxu0 %v529
        %635 = vmatpush.bf16.msra.mxu0 %v527
        %636 = vmatpush.bf16.msra.mxu0 %v525
        %637 = vmatpush.bf16.msra.mxu0 %v523
        %638 = vmatpush.bf16.msra.mxu0 %v521
        %639 = vmatpush.bf16.msra.mxu0 %v519
        %640 = vmatpush.bf16.msra.mxu0 %v517
        %641 = vmatpush.bf16.msra.mxu0 %v515
        %642 = vmatmul.bf16.gmra.mxu0 %v210
        %v643 = vpop.f32.mrf.mxu0
        %v644 = vadd.f32 %v631, %v643
        %v645 = vpop.f32.mrf.mxu0
        %646 = vdwg.mxu0
        %647 = vmatpush.bf16.msra.mxu0 %v482
        %648 = vmatpush.bf16.msra.mxu0 %v480
        %649 = vmatpush.bf16.msra.mxu0 %v478
        %650 = vmatpush.bf16.msra.mxu0 %v476
        %651 = vmatpush.bf16.msra.mxu0 %v474
        %652 = vmatpush.bf16.msra.mxu0 %v472
        %653 = vmatpush.bf16.msra.mxu0 %v470
        %654 = vmatpush.bf16.msra.mxu0 %v468
        %655 = vmatmul.bf16.gmra.mxu0 %v207
        %v656 = vpop.f32.mrf.mxu0
        %v657 = vadd.f32 0.0, %v656
        %v658 = vpop.f32.mrf.mxu0
        %659 = vdwg.mxu0
        %660 = vmatpush.bf16.msra.mxu0 %v498
        %661 = vmatpush.bf16.msra.mxu0 %v496
        %662 = vmatpush.bf16.msra.mxu0 %v494
        %663 = vmatpush.bf16.msra.mxu0 %v492
        %664 = vmatpush.bf16.msra.mxu0 %v490
        %665 = vmatpush.bf16.msra.mxu0 %v488
        %666 = vmatpush.bf16.msra.mxu0 %v486
        %667 = vmatpush.bf16.msra.mxu0 %v484
        %668 = vmatmul.bf16.gmra.mxu0 %v208
        %v669 = vpop.f32.mrf.mxu0
        %v670 = vadd.f32 %v657, %v669
        %v671 = vpop.f32.mrf.mxu0
        %672 = vdwg.mxu0
        %673 = vmatpush.bf16.msra.mxu0 %v514
        %674 = vmatpush.bf16.msra.mxu0 %v512
        %675 = vmatpush.bf16.msra.mxu0 %v510
        %676 = vmatpush.bf16.msra.mxu0 %v508
        %677 = vmatpush.bf16.msra.mxu0 %v506
        %678 = vmatpush.bf16.msra.mxu0 %v504
        %679 = vmatpush.bf16.msra.mxu0 %v502
        %680 = vmatpush.bf16.msra.mxu0 %v500
        %681 = vmatmul.bf16.gmra.mxu0 %v209
        %v682 = vpop.f32.mrf.mxu0
        %v683 = vadd.f32 %v670, %v682
        %v684 = vpop.f32.mrf.mxu0
        %685 = vdwg.mxu0
        %686 = vmatpush.bf16.msra.mxu0 %v530
        %687 = vmatpush.bf16.msra.mxu0 %v528
        %688 = vmatpush.bf16.msra.mxu0 %v526
        %689 = vmatpush.bf16.msra.mxu0 %v524
        %690 = vmatpush.bf16.msra.mxu0 %v522
        %691 = vmatpush.bf16.msra.mxu0 %v520
        %692 = vmatpush.bf16.msra.mxu0 %v518
        %693 = vmatpush.bf16.msra.mxu0 %v516
        %694 = vmatmul.bf16.gmra.mxu0 %v210
        %v695 = vpop.f32.mrf.mxu0
        %v696 = vadd.f32 %v683, %v695
        %v697 = vpop.f32.mrf.mxu0
        %698 = vdwg.mxu0
        %s699 = smul.u32 %s25, 256
        %s700 = sshra.s32 %s699, 7
        %s701 = sand.u32 %s699, 127
        %s702 = smul.addr %s700, 8
        %s703 = scalar_lea.vmem [#allocation2], %s702
        %v704 = vld [vmem:[%s703] sm:$0xff]
        %v705 = vld [vmem:[%s703 + $0x8] sm:$0xff]
        %v706 = vadd.f32 %v704, %v644
        %v707 = vadd.f32 %v705, %v696
        %708 = vst [vmem:[%s200] sm:$0xff] %v706
        %709 = vst [vmem:[%s200 + $0x8] sm:$0xff] %v707
        %s710 = sand.u32 %s94, 1
        %s711 = scalar_lea.sflag [#allocation4], %s710
        %s712 = sand.u32 %s94, 1
        %s713 = smul.addr %s712, 16
        %s714 = scalar_lea.vmem [#allocation7], %s713
        // Predicated region
        $region37: #{tpu_custom_call.1} parent=27 // pred_check
          %p715 = pneg %p104
        $region38: #{tpu_custom_call.1} parent=27 // pred_check_branch
          %717 = sbr.rel (%p715) target = $region40
        $region39: #{tpu_custom_call.1} parent=27 // pred_region
          %s718 = smul.u32 2, %s25
          %720 = vsyncadd %s711, 0
          %s721 = smul.addr %s24, 4
          %s722 = sadd.s32 %s718, %s721
          %s723 = smul.addr %s722, 8
          %s724 = scalar_lea.hbm %s2, %s723
          %s726 = sshll.u32 %s714, 4
          %s727 = int_to_ptr.vmem [resolvable:$true] %s726
          %s728 = sshll.u32 %s724, 4
          %s729 = int_to_ptr.hbm [resolvable:$true] %s728
          %731 = dma.vmem_to_hbm [thread:$0]  %s727, 256, %s729, %s711
        $region40: #{tpu_custom_call.1} parent=27 // pred_fallthru
          _
      $region28: #{tpu_custom_call.1} parent=5 // pred_fallthru
        _
      %p732 = scmp.le.s32.totalorder 2, %s15
      // Predicated region
      $region41: #{tpu_custom_call.1} parent=5 // pred_check
        %p733 = pneg %p732
      $region42: #{tpu_custom_call.1} parent=5 // pred_check_branch
        %735 = sbr.rel (%p733) target = $region44
      $region43: #{tpu_custom_call.1} parent=5 // pred_region
        %s736 = ssub.s32 %s15, 2
        // Predicated region
        $region45: #{tpu_custom_call.1} parent=43 // pred_check
          %p737 = pneg %p110
        $region46: #{tpu_custom_call.1} parent=43 // pred_check_branch
          %739 = sbr.rel (%p737) target = $region48
        $region47: #{tpu_custom_call.1} parent=43 // pred_region
          %s740 = sand.u32 %s95, 1
          %s741 = scalar_lea.sflag [#allocation4], %s740
          %s742 = sand.u32 %s95, 1
          %s743 = smul.addr %s742, 16
          %s744 = scalar_lea.vmem [#allocation7], %s743
          %746 = dma.done %s741, 256
        $region48: #{tpu_custom_call.1} parent=43 // pred_fallthru
          _
      $region44: #{tpu_custom_call.1} parent=5 // pred_fallthru
        _
    $region6: #{tpu_custom_call.1} parent=1 // loop_footer
      %s19 = sadd.s32 1, %s15
    $region7: #{tpu_custom_call.1} parent=1 // loop_footer_branch
      %14 = sbr.rel target = $region3
    $region8: #{tpu_custom_call.1} parent=1 // loop_exit
      _
    %747 = vsyncpa [#allocation3], 1
    %s748 = scalar_lea.sflag [#allocation3], 1
    %749 = vsyncpa %s748, 1
    %750 = vsyncpa [#allocation6], 1
    %s751 = scalar_lea.sflag [#allocation6], 1
    %752 = vsyncpa %s751, 1
    %753 = vsyncpa [#allocation4], 1
    %s754 = scalar_lea.sflag [#allocation4], 1
    %755 = vsyncpa %s754, 1

</llo_original>
